<compile_context>
chip_gen: v7x
topology: tpu7x:2x2x1
jax: 0.10.0
libtpu: 0.0.40
codegen_flags: <defaults>
</compile_context>

<pallas_src>
import math
from functools import partial

import jax
import jax.numpy as jnp
from jax.experimental import pallas as pl
from jax.experimental.pallas import tpu as pltpu


def _round_up(x, m):
    return ((x + m - 1) // m) * m


def _patch_embed_kernel(x_ref, w_ref, b_ref, o_ref):
    # x_ref: (TM, Kp) bf16, w_ref: (Kp, TD) bf16, b_ref: (1, TD) f32,
    # o_ref: (TM, TD) f32.  MXU matmul with f32 accumulation, f32 bias add.
    acc = jnp.dot(x_ref[...], w_ref[...], preferred_element_type=jnp.float32)
    o_ref[...] = (acc + b_ref[...]).astype(o_ref.dtype)


def _vmem_limit_bytes():
    """Generation-aware VMEM ceiling: ~75% of physical, capped at 100 MiB.

    v5e/v6e (128 MiB physical) -> ~96 MiB; v7x (64 MiB) -> 48 MiB.
    Falls back to the conservative v7x value if the query is unavailable.
    """
    try:
        cap = getattr(pltpu.get_tpu_info(), "vmem_capacity_bytes", 64 << 20)
    except Exception:  # pragma: no cover - defensive on exotic runtimes
        cap = 64 << 20
    return int(min(cap * 3 // 4, 100 << 20))


def _choose_tile_d(Dp, Kp, budget_bytes):
    """D-tile: usually all of Dp; tiled down (128-multiples dividing Dp) only
    when the (possibly 2x-buffered) weight slab would eat too much VMEM."""
    w_budget = max(budget_bytes // 3, 1 << 20)
    for td in (Dp, 2048, 1024, 512, 256, 128):
        if td <= Dp and Dp % td == 0 and 2 * (Kp * td * 2 + td * 4) <= w_budget:
            return td
    return 128  # Dp is a multiple of 128, so this always divides it.


def _choose_tile_m(M, Kp, TD, budget_bytes):
    """M-tile: 256-multiples, <=1024 (roofline saturates ~512); prefer
    padding waste <10% and >=8 grid steps (pipelining + v7x 2-TC split)."""
    in_b, out_b = 2, 4
    resident = 2 * (Kp * TD * in_b + TD * out_b)   # weight+bias, assume 2x-buffered
    per_row = 2 * (Kp * in_b + TD * out_b)         # double-buffered in/out tiles
    cap = (budget_bytes - resident) // per_row

    if M <= 512:
        # Tiny problem: single tile, rounded to the bf16 (16, 128) packing.
        return min(max(16, _round_up(M, 16)), max(16, (int(cap) // 16) * 16))

    candidates = [tm for tm in (1024, 512, 256) if tm <= cap]
    if not candidates:
        # Pathologically tight VMEM (huge K): largest 16-multiple that fits.
        return max(16, (int(cap) // 16) * 16)

    def ok(tm, need_steps):
        mp = _round_up(M, tm)
        return (mp - M) / mp <= 0.10 and mp // tm >= need_steps

    for need_steps in (8, 2, 0):
        good = [tm for tm in candidates if ok(tm, need_steps)]
        if good:
            return max(good)
    # Nothing meets the waste bound: minimize padded rows.
    return min(candidates, key=lambda tm: _round_up(M, tm))


@partial(jax.jit, static_argnames=("patch_size",))
def patch_embed(x, weight, bias, patch_size):
    """x: (B, C, H, W) float32. weight: (D, C, P, P). bias: (D,). Returns (B, N, D)."""
    B, C, H, W = x.shape
    D = weight.shape[0]
    P = patch_size
    assert H % P == 0 and W % P == 0
    Hp, Wp = H // P, W // P
    N = Hp * Wp
    K = C * P * P
    M = B * N

    # bf16 for the streamed MXU operands; accumulate in f32 inside the kernel.
    x_bf = x.astype(jnp.bfloat16)
    w_bf = weight.astype(jnp.bfloat16)

    # Extract non-overlapping patches; flatten each patch in (c, kh, kw) order
    # to match PyTorch's Conv2d weight.reshape(D, C*P*P).  allow_input_fusion
    # (below) lets XLA fuse this reshape/transpose/convert/pad producer into
    # the pallas input stream instead of materializing it to HBM.
    patches = x_bf.reshape(B, C, Hp, P, Wp, P)
    patches = patches.transpose(0, 2, 4, 1, 3, 5).reshape(M, K)

    w_flat = w_bf.reshape(D, K).T                    # (K, D) bf16
    b_row = bias.astype(jnp.float32).reshape(1, D)   # (1, D) f32

    # Lane-dense padding: last dims -> multiples of 128 (unmasked vld/vst).
    # Zero padding along K/D does not change the matmul result.
    Kp, Dp = _round_up(K, 128), _round_up(D, 128)

    vmem_limit = _vmem_limit_bytes()
    budget = vmem_limit - (8 << 20)                  # headroom for Mosaic scratch
    TD = _choose_tile_d(Dp, Kp, budget)
    TM = _choose_tile_m(M, Kp, TD, budget)
    Mp = _round_up(M, TM)

    patches = jnp.pad(patches, ((0, Mp - M), (0, Kp - K)))
    w_flat = jnp.pad(w_flat, ((0, Kp - K), (0, Dp - D)))
    b_row = jnp.pad(b_row, ((0, 0), (0, Dp - D)))

    grid = (Mp // TM, Dp // TD)

    cost = pl.CostEstimate(
        flops=2 * Mp * Kp * Dp,
        transcendentals=0,
        bytes_accessed=Mp * Kp * 2 + Kp * Dp * 2 + Mp * Dp * 4,
    )

    out = pl.pallas_call(
        _patch_embed_kernel,
        out_shape=jax.ShapeDtypeStruct((Mp, Dp), jnp.float32),
        grid_spec=pltpu.PrefetchScalarGridSpec(
            num_scalar_prefetch=0,
            grid=grid,
            in_specs=[
                pl.BlockSpec((TM, Kp), lambda i, j: (i, 0)),   # streamed patches
                pl.BlockSpec((Kp, TD), lambda i, j: (0, j)),   # weight (VMEM-resident / D-tiled)
                pl.BlockSpec((1, TD), lambda i, j: (0, j)),    # bias
            ],
            out_specs=pl.BlockSpec((TM, TD), lambda i, j: (i, j)),
        ),
        compiler_params=pltpu.CompilerParams(
            # M (and D if tiled) axes are independent -> shard across v7x's 2 TCs.
            dimension_semantics=("parallel", "parallel"),
            vmem_limit_bytes=vmem_limit,
            # Let the patchify producer fuse into the pallas input stream so the
            # (M, K) patch matrix never takes its own HBM round trip.
            allow_input_fusion=[True, False, False],
        ),
        cost_estimate=cost,
    )(patches, w_flat, b_row)

    # TODO(synk): if downstream accepts bf16 activations, emit bf16 here to
    # halve the M x D writeback on mem-bound v6e/v7x.
    out = out[:M, :D].astype(x.dtype)
    return out.reshape(B, N, D)


def init_params(key, in_channels, embed_dim, patch_size):
    """Deterministic init matching the module's __init__ (xavier_uniform on the
    flattened weight view; PyTorch default uniform init for the conv bias)."""
    D, C, P = embed_dim, in_channels, patch_size
    K = C * P * P
    k_w, k_b = jax.random.split(key)
    # xavier_uniform on view (D, K): bound = sqrt(6 / (fan_in + fan_out))
    bound_w = math.sqrt(6.0 / (K + D))
    weight = jax.random.uniform(k_w, (D, C, P, P), jnp.float32, -bound_w, bound_w)
    # Conv2d default bias init: U(-1/sqrt(fan_in), 1/sqrt(fan_in)), fan_in = C*P*P
    bound_b = 1.0 / math.sqrt(K)
    bias = jax.random.uniform(k_b, (D,), jnp.float32, -bound_b, bound_b)
    return weight, bias


if __name__ == "__main__":
    B, C, H, W = 2, 4, 16, 16
    patch_size = 4
    embed_dim = 32

    key = jax.random.PRNGKey(0)
    k_x, k_p = jax.random.split(key)
    x = jax.random.normal(k_x, (B, C, H, W), jnp.float32)
    weight, bias = init_params(k_p, C, embed_dim, patch_size)

    out = patch_embed(x, weight, bias, patch_size)
    out = jax.block_until_ready(out)

    # Sanity check against a pure-JAX f32 reference of the same conv-as-matmul.
    # (Kernel computes in bf16 with f32 accumulation -> loosened tolerance.)
    Hp, Wp = H // patch_size, W // patch_size
    ref_patches = x.reshape(B, C, Hp, patch_size, Wp, patch_size)
    ref_patches = ref_patches.transpose(0, 2, 4, 1, 3, 5).reshape(B, Hp * Wp, -1)
    ref = ref_patches @ weight.reshape(embed_dim, -1).T + bias[None, None, :]
    assert out.shape == (B, Hp * Wp, embed_dim)
    assert jnp.allclose(out, ref, atol=5e-2, rtol=5e-2)

    print("KERNEL_OK")
</pallas_src>

<mosaic_0001>
module attributes {stable_mosaic.version = 11 : i64} {
  func.func @_patch_embed_kernel(%arg0: i32, %arg1: i32, %arg2: memref<32x128xbf16, #tpu.memory_space<vmem>>, %arg3: memref<128x128xbf16, #tpu.memory_space<vmem>>, %arg4: memref<1x128xf32, #tpu.memory_space<vmem>>, %arg5: memref<32x128xf32, #tpu.memory_space<vmem>>) attributes {dimension_semantics = [#tpu.dimension_semantics<parallel>, #tpu.dimension_semantics<parallel>], iteration_bounds = array<i64: 1, 1>, scalar_prefetch = 0 : i64, scratch_operands = 0 : i64, tpu.core_type = #tpu.core_type<tc>, window_params = [{transform_indices = @transform_0, window_bounds = array<i64: 32, 128>}, {transform_indices = @transform_1, window_bounds = array<i64: 128, 128>}, {transform_indices = @transform_2, window_bounds = array<i64: 1, 128>}, {transform_indices = @transform_3, window_bounds = array<i64: 32, 128>}]} {
    %c0 = arith.constant 0 : index
    %c0_0 = arith.constant 0 : index
    %0 = vector.load %arg2[%c0, %c0_0] : memref<32x128xbf16, #tpu.memory_space<vmem>>, vector<32x128xbf16>
    %c0_1 = arith.constant 0 : index
    %c0_2 = arith.constant 0 : index
    %1 = vector.load %arg3[%c0_1, %c0_2] : memref<128x128xbf16, #tpu.memory_space<vmem>>, vector<128x128xbf16>
    %cst = arith.constant dense<0.000000e+00> : vector<32x128xf32>
    %2 = tpu.matmul %0, %1, %cst {dimension_numbers = #tpu.dot_dimension_numbers<[1], [0], [0], [1], [0, 0, 1, 1], [], []>} : vector<32x128xbf16>, vector<128x128xbf16>, vector<32x128xf32> -> vector<32x128xf32>
    %c0_3 = arith.constant 0 : index
    %c0_4 = arith.constant 0 : index
    %3 = vector.load %arg4[%c0_3, %c0_4] : memref<1x128xf32, #tpu.memory_space<vmem>>, vector<1x128xf32>
    %4 = vector.broadcast %3 : vector<1x128xf32> to vector<32x128xf32>
    %5 = arith.addf %2, %4 : vector<32x128xf32>
    %c0_5 = arith.constant 0 : index
    %c0_6 = arith.constant 0 : index
    %6 = vector.load %arg5[%c0_5, %c0_6] : memref<32x128xf32, #tpu.memory_space<vmem>>, vector<32x128xf32>
    tpu.vector_store %arg5[%c0_5, %c0_6], %5 {strides = array<i32>} : memref<32x128xf32, #tpu.memory_space<vmem>>, vector<32x128xf32>,
    return
  }
  func.func @transform_0(%arg0: i32, %arg1: i32) -> (i32, i32) {
    %c0_i32 = arith.constant 0 : i32
    %c0_i32_0 = arith.constant 0 : i32
    return %arg0, %c0_i32 : i32, i32
  }
  func.func @transform_1(%arg0: i32, %arg1: i32) -> (i32, i32) {
    %c0_i32 = arith.constant 0 : i32
    %c0_i32_0 = arith.constant 0 : i32
    return %c0_i32, %arg1 : i32, i32
  }
  func.func @transform_2(%arg0: i32, %arg1: i32) -> (i32, i32) {
    %c0_i32 = arith.constant 0 : i32
    %c0_i32_0 = arith.constant 0 : i32
    return %c0_i32, %arg1 : i32, i32
  }
  func.func @transform_3(%arg0: i32, %arg1: i32) -> (i32, i32) {
    %c0_i32 = arith.constant 0 : i32
    return %arg0, %arg1 : i32, i32
  }
}

</mosaic_0001>

<llo_original>
// kernel: patch_embed.2
$region0: #{patch_embed.2}
  #allocation0 [shape = 'u32[]', space=smem, size = 0x4, offset = 0x4, fixed_abs, tag = 'smem constant byte address 0x4 - core index']
  #allocation1 [shape = 'u32[144,128]{1,0:T(1,128)}', space=vmem, size = 0x12000, scoped, tag = 'internal scratch']
  #allocation2 [shape = 'u32[2048]{0}', space=vmem, size = 0x2000, scoped, tag = 'scoped memory for patch_embed.2']
  #allocation3 [shape = 'u32[2048]{0}', space=vmem, size = 0x2000, scoped, tag = 'scoped memory for patch_embed.2']
  #allocation4 [shape = 'u32[2048]{0}', space=vmem, size = 0x2000, scoped, tag = 'scoped memory for patch_embed.2']
  #allocation5 [shape = 'u32[2048]{0}', space=vmem, size = 0x2000, scoped, tag = 'scoped memory for patch_embed.2']
  #allocation6 [shape = 'u32[2048]{0}', space=vmem, size = 0x2000, scoped, tag = 'scoped memory for patch_embed.2']
  %s0 = inlined_call_operand.vmem [shape: bf16[128,128], index: 0, kind: input, shape index: {}]
  %s1 = inlined_call_operand.vmem [shape: f32[1,128], index: 1, kind: input, shape index: {}]
  %s2 = inlined_call_operand.vmem [shape: bf16[32,64], index: 2, kind: input, shape index: {}]
  %s3 = inlined_call_operand.<no memory space> [shape: bf16[], index: 3, kind: input, shape index: {}]
  %s4 = inlined_call_operand.hbm [shape: f32[32,128], index: 4, kind: output, shape index: {}]
  %s5 = sld [smem:[#allocation0]]
  $region22: #{patch_embed.2} parent=0
    _
  %s7 = ssub.s32 1, %s5
  %s8 = scalar_select 0, %s7, %s5
  %v9 = vstv %s3
  %v10 = vunpack.i.l.bf16 %v9
  %v12 = vunpack.i.h.bf16 %v9
  $region1: #{patch_embed.2} parent=0
    #allocation7 [shape = 'u8[16384]{0}', space=vmem, size = 0x4000, scoped, tag = 'output window, operand 0, single buffered']
    #allocation8 [shape = 's32[1]{0}', space=sflag, size = 0x4, scoped, tag = 'scoped memory for patch_embed.2']
    #allocation9 [shape = 'u8[8192]{0}', space=vmem, size = 0x2000, dematerialized = true, scoped, tag = 'FusionAdapter Buffer %fusion.1 = bf16[32,128]{1,0:T(8,128)(2,1)} fusion(%param_2.1, %param_3), kind=kLoop, calls=%fused_computation.2.clone, metadata={op_name="jit(patch_embed)/jit(_pad)/pad" stack_frame_id=13}']
    %14 = vsyncpa [#allocation8], 0
    // Predicated region
    $region2: #{patch_embed.2} parent=1 // pred_check
      _
    $region3: #{patch_embed.2} parent=1 // pred_check_branch
      %16 = sbr.rel (0) target = $region5
    $region4: #{patch_embed.2} parent=1 // pred_region
      _
    $region5: #{patch_embed.2} parent=1 // pred_fallthru
      _
    // Predicated region
    $region6: #{patch_embed.2} parent=1 // pred_check
      _
    $region7: #{patch_embed.2} parent=1 // pred_check_branch
      %18 = sbr.rel (0) target = $region9
    $region8: #{patch_embed.2} parent=1 // pred_region
      _
    $region9: #{patch_embed.2} parent=1 // pred_fallthru
      _
    // Predicated region
    $region10: #{patch_embed.2} parent=1 // pred_check
      _
    $region11: #{patch_embed.2} parent=1 // pred_check_branch
      %20 = sbr.rel (0) target = $region13
    $region12: #{patch_embed.2} parent=1 // pred_region
      _
    $region13: #{patch_embed.2} parent=1 // pred_fallthru
      _
    %s22 = sor.u32 255, 127
    %s23 = sand.u32 %s22, 85
    %s24 = sshrl.u32 %s23, 1
    %s25 = sor.u32 %s23, %s24
    %s26 = sand.u32 51, %s25
    %s27 = sshrl.u32 %s26, 2
    %s28 = sor.u32 %s26, %s27
    %s29 = sand.u32 15, %s28
    %v30 = vld [vmem:[%s2] sm:%s29]
    %v31 = vunpack.c.l.bf16 %v30
    %v32 = vunpack.c.h.bf16 %v30
    %v33 = vlaneseq
    %v34 = vand.u32 %v33, 127
    %vm36 = vcmp.lt.s32.totalorder %v34, 64
    %v37 = vsel %vm36, %v31, %v10
    %v38 = vpack.c.bf16 0.0, %v37
    %40 = vst [vmem:[#allocation9] sm:$0xf] %v38
    %s41 = scalar_lea.vmem %s2, 4
    %s43 = sor.u32 255, 127
    %s44 = sand.u32 %s43, 85
    %s45 = sshrl.u32 %s44, 1
    %s46 = sor.u32 %s44, %s45
    %s47 = sand.u32 51, %s46
    %s48 = sshrl.u32 %s47, 2
    %s49 = sor.u32 %s47, %s48
    %s50 = sand.u32 15, %s49
    %v51 = vld [vmem:[%s41] sm:%s50]
    %v52 = vunpack.c.l.bf16 %v51
    %v53 = vunpack.c.h.bf16 %v51
    %v54 = vlaneseq
    %v55 = vand.u32 %v54, 127
    %vm57 = vcmp.lt.s32.totalorder %v55, 64
    %v58 = vsel %vm57, %v52, %v10
    %s59 = scalar_lea.vmem [#allocation9], 4
    %v60 = vpack.c.bf16 0.0, %v58
    %62 = vst [vmem:[%s59] sm:$0xf] %v60
    %s63 = scalar_lea.vmem %s2, 8
    %s65 = sor.u32 255, 127
    %s66 = sand.u32 %s65, 85
    %s67 = sshrl.u32 %s66, 1
    %s68 = sor.u32 %s66, %s67
    %s69 = sand.u32 51, %s68
    %s70 = sshrl.u32 %s69, 2
    %s71 = sor.u32 %s69, %s70
    %s72 = sand.u32 15, %s71
    %v73 = vld [vmem:[%s63] sm:%s72]
    %v74 = vunpack.c.l.bf16 %v73
    %v75 = vunpack.c.h.bf16 %v73
    %v76 = vlaneseq
    %v77 = vand.u32 %v76, 127
    %vm79 = vcmp.lt.s32.totalorder %v77, 64
    %v80 = vsel %vm79, %v74, %v10
    %s81 = scalar_lea.vmem [#allocation9], 8
    %v82 = vpack.c.bf16 0.0, %v80
    %84 = vst [vmem:[%s81] sm:$0xf] %v82
    %s85 = scalar_lea.vmem %s2, 12
    %s87 = sor.u32 255, 127
    %s88 = sand.u32 %s87, 85
    %s89 = sshrl.u32 %s88, 1
    %s90 = sor.u32 %s88, %s89
    %s91 = sand.u32 51, %s90
    %s92 = sshrl.u32 %s91, 2
    %s93 = sor.u32 %s91, %s92
    %s94 = sand.u32 15, %s93
    %v95 = vld [vmem:[%s85] sm:%s94]
    %v96 = vunpack.c.l.bf16 %v95
    %v97 = vunpack.c.h.bf16 %v95
    %v98 = vlaneseq
    %v99 = vand.u32 %v98, 127
    %vm101 = vcmp.lt.s32.totalorder %v99, 64
    %v102 = vsel %vm101, %v96, %v10
    %s103 = scalar_lea.vmem [#allocation9], 12
    %v104 = vpack.c.bf16 0.0, %v102
    %106 = vst [vmem:[%s103] sm:$0xf] %v104
    %v108 = vld [vmem:[#allocation9] sm:$0xf]
    %v109 = vld [vmem:[#allocation9 + $0x4] sm:$0xf]
    %v110 = vld [vmem:[#allocation9 + $0x8] sm:$0xf]
    %v111 = vld [vmem:[#allocation9 + $0xc] sm:$0xf]
    %v112 = vld [vmem:[%s0] sm:$0xf]
    %v113 = vld [vmem:[%s0 + $0x4] sm:$0xf]
    %v114 = vld [vmem:[%s0 + $0x8] sm:$0xf]
    %v115 = vld [vmem:[%s0 + $0xc] sm:$0xf]
    %v116 = vld [vmem:[%s0 + $0x10] sm:$0xf]
    %v117 = vld [vmem:[%s0 + $0x14] sm:$0xf]
    %v118 = vld [vmem:[%s0 + $0x18] sm:$0xf]
    %v119 = vld [vmem:[%s0 + $0x1c] sm:$0xf]
    %v120 = vld [vmem:[%s0 + $0x20] sm:$0xf]
    %v121 = vld [vmem:[%s0 + $0x24] sm:$0xf]
    %v122 = vld [vmem:[%s0 + $0x28] sm:$0xf]
    %v123 = vld [vmem:[%s0 + $0x2c] sm:$0xf]
    %v124 = vld [vmem:[%s0 + $0x30] sm:$0xf]
    %v125 = vld [vmem:[%s0 + $0x34] sm:$0xf]
    %v126 = vld [vmem:[%s0 + $0x38] sm:$0xf]
    %v127 = vld [vmem:[%s0 + $0x3c] sm:$0xf]
    %v128 = vld [vmem:[%s1] sm:$0x1]
    %v130 = vlaneseq
    %v131 = vshrl.u32 %v130, 7
    %v132 = vsub.s32 0, %v131
    %v133 = vrot.slane %v128, %v132
    %v139 = vunpack.c.l.b16 %v108
    %v140 = vunpack.c.l.b16 %v109
    %v141 = vunpack.c.l.b16 %v110
    %v142 = vunpack.c.l.b16 %v111
    %v143 = vpack.c.b16 %v140, %v139
    %v144 = vpack.c.b16 %v142, %v141
    %v163 = vunpack.c.l.b16 %v112
    %v164 = vunpack.c.l.b16 %v113
    %v165 = vunpack.c.l.b16 %v114
    %v166 = vunpack.c.l.b16 %v115
    %v167 = vunpack.c.l.b16 %v116
    %v168 = vunpack.c.l.b16 %v117
    %v169 = vunpack.c.l.b16 %v118
    %v170 = vunpack.c.l.b16 %v119
    %v171 = vunpack.c.l.b16 %v120
    %v172 = vunpack.c.l.b16 %v121
    %v173 = vunpack.c.l.b16 %v122
    %v174 = vunpack.c.l.b16 %v123
    %v175 = vunpack.c.l.b16 %v124
    %v176 = vunpack.c.l.b16 %v125
    %v177 = vunpack.c.l.b16 %v126
    %v178 = vunpack.c.l.b16 %v127
    %v179 = vpack.c.b16 %v164, %v163
    %v180 = vpack.c.b16 %v166, %v165
    %v181 = vpack.c.b16 %v168, %v167
    %v182 = vpack.c.b16 %v170, %v169
    %v183 = vpack.c.b16 %v172, %v171
    %v184 = vpack.c.b16 %v174, %v173
    %v185 = vpack.c.b16 %v176, %v175
    %v186 = vpack.c.b16 %v178, %v177
    %195 = vmatprep.subr.bf16.mxu0 0
    %196 = vmatpush1.bf16.msra.mxu0 %v179
    %197 = vmatprep.subr.bf16.mxu0 0
    %198 = vmatpush1.bf16.msra.mxu0 %v180
    %199 = vmatprep.subr.bf16.mxu0 0
    %200 = vmatpush1.bf16.msra.mxu0 %v181
    %201 = vmatprep.subr.bf16.mxu0 0
    %202 = vmatpush1.bf16.msra.mxu0 %v182
    %203 = vmatprep.subr.bf16.mxu0 0
    %204 = vmatpush1.bf16.msra.mxu0 %v183
    %205 = vmatprep.subr.bf16.mxu0 0
    %206 = vmatpush1.bf16.msra.mxu0 %v184
    %207 = vmatprep.subr.bf16.mxu0 0
    %208 = vmatpush1.bf16.msra.mxu0 %v185
    %209 = vmatprep.subr.bf16.mxu0 0
    %210 = vmatpush1.bf16.msra.mxu0 %v186
    %211 = vmatprep.subr.bf16.mxu0 0
    %212 = vmatpush1.bf16.msra.mxu0 0
    %213 = vmatprep.subr.bf16.mxu0 0
    %214 = vmatpush1.bf16.msra.mxu0 0
    %215 = vmatprep.subr.bf16.mxu0 0
    %216 = vmatpush1.bf16.msra.mxu0 0
    %217 = vmatprep.subr.bf16.mxu0 0
    %218 = vmatpush1.bf16.msra.mxu0 0
    %219 = vmatprep.subr.bf16.mxu0 0
    %220 = vmatpush1.bf16.msra.mxu0 0
    %221 = vmatprep.subr.bf16.mxu0 0
    %222 = vmatpush1.bf16.msra.mxu0 0
    %223 = vmatprep.subr.bf16.mxu0 0
    %224 = vmatpush1.bf16.msra.mxu0 0
    %225 = vmatprep.subr.bf16.mxu0 0
    %226 = vmatpush1.bf16.msra.mxu0 0
    %227 = vmatprep.mubr.bf16.mxu0 0
    %228 = vmatmul.mubr.bf16.gmra.mrb[0].mxu0 %v143
    %v229 = vpop.f32.mrb[0].mxu0
    %v230 = vadd.f32 %v133, %v229
    %v231 = vpop.f32.mrb[0].mxu0
    %v232 = vpop.f32.mrb[0].mxu0
    %v233 = vadd.f32 %v133, %v232
    %v234 = vpop.f32.mrb[0].mxu0
    %235 = vmatprep.mubr.bf16.mxu0 0
    %236 = vmatmul.mubr.bf16.gmra.mrb[0].mxu0 %v144
    %v237 = vpop.f32.mrb[0].mxu0
    %v238 = vadd.f32 %v133, %v237
    %v239 = vpop.f32.mrb[0].mxu0
    %v240 = vpop.f32.mrb[0].mxu0
    %v241 = vadd.f32 %v133, %v240
    %v242 = vpop.f32.mrb[0].mxu0
    %243 = vdwg.mxu0
    %244 = vst [vmem:[#allocation7] sm:$0xff] %v230
    %245 = vst [vmem:[#allocation7 + $0x8] sm:$0xff] %v233
    %246 = vst [vmem:[#allocation7 + $0x10] sm:$0xff] %v238
    %247 = vst [vmem:[#allocation7 + $0x18] sm:$0xff] %v241
    // Predicated region
    $region14: #{patch_embed.2} parent=1 // pred_check
      _
    $region15: #{patch_embed.2} parent=1 // pred_check_branch
      %249 = sbr.rel (0) target = $region17
    $region16: #{patch_embed.2} parent=1 // pred_region
      %s251 = ssub.s32 512, 512
      %252 = vsyncadd [#allocation8], %s251
      %s253 = sshll.u32 [#allocation7], 4
      %s254 = int_to_ptr.vmem [resolvable:$true] %s253
      %259 = dma.vmem_to_hbm [thread:$0]  %s254, 512, %s4, [#allocation8], 128, 128, 8
    $region17: #{patch_embed.2} parent=1 // pred_fallthru
      _
    // Predicated region
    $region18: #{patch_embed.2} parent=1 // pred_check
      _
    $region19: #{patch_embed.2} parent=1 // pred_check_branch
      %261 = sbr.rel (0) target = $region21
    $region20: #{patch_embed.2} parent=1 // pred_region
      %262 = dma.done [#allocation8], 512
    $region21: #{patch_embed.2} parent=1 // pred_fallthru
      _
    %263 = vsyncpa [#allocation8], 1

</llo_original>
